<compile_context>
chip_gen: v6e
topology: v6e:2x2x1
jax: 0.10.0
libtpu: 0.0.40
codegen_flags: <defaults>
</compile_context>

<pallas_src>
import functools

import jax
import jax.numpy as jnp
from jax.experimental import pallas as pl
from jax.experimental.pallas import tpu as pltpu


def _round_up(n, m):
    return ((n + m - 1) // m) * m


def _mamba_block_kernel(x_ref, win_ref, bin_ref, wf_ref, bf_ref,
                        wout_ref, bout_ref, gamma_ref, beta_ref, out_ref,
                        *, n_feat):
    x = x_ref[...]                                   # (tm, Dp) f32 (residual)
    x_c = x.astype(win_ref.dtype)                    # bf16 operand for MXU

    # in_proj
    h = jnp.dot(x_c, win_ref[...],
                preferred_element_type=jnp.float32) + bin_ref[...]

    # fused (I + W_B + W_C) projection + ReLU  == relu(h + s_B(h) + s_C(h))
    h = jnp.dot(h.astype(wf_ref.dtype), wf_ref[...],
                preferred_element_type=jnp.float32) + bf_ref[...]
    h = jnp.maximum(h, jnp.float32(0.0))

    # out_proj
    y = jnp.dot(h.astype(wout_ref.dtype), wout_ref[...],
                preferred_element_type=jnp.float32) + bout_ref[...]

    # TODO(synk): nn.Dropout is identity in eval mode; train-mode stochastic
    # dropout (pltpu.prng_random_bits mask) intentionally not applied here.

    # LayerNorm(y + x_in) over the REAL feature count n_feat, eps = 1e-5.
    # Padded feature columns are exactly zero, so sums over the padded width
    # equal sums over the real width; divide by n_feat, not the padded width.
    z = y + x
    inv_n = jnp.float32(1.0 / n_feat)
    mean = jnp.sum(z, axis=-1, keepdims=True) * inv_n
    mean_sq = jnp.sum(z * z, axis=-1, keepdims=True) * inv_n
    var = mean_sq - mean * mean
    z_hat = (z - mean) * jax.lax.rsqrt(var + jnp.float32(1e-5))
    out_ref[...] = z_hat * gamma_ref[...] + beta_ref[...]


@functools.partial(jax.jit, static_argnames=("tm", "compute_dtype"))
def custom_mamba_block(x, params, *, tm=256, compute_dtype=jnp.bfloat16):
    """x: (batch, seq, d_input) float32.  Returns the same shape."""
    batch, seq, d_input = x.shape
    d_model = params["w_in"].shape[1]
    rows = batch * seq

    dp = _round_up(d_input, 128)          # lane-dense feature dim
    mp = _round_up(d_model, 128)          # lane-dense hidden dim
    tm_eff = min(tm, _round_up(rows, 8))  # row tile (multiple of 8 sublanes)
    rows_p = _round_up(rows, tm_eff)

    f32 = jnp.float32
    x2d = x.reshape(rows, d_input).astype(f32)
    x2d = jnp.pad(x2d, ((0, rows_p - rows), (0, dp - d_input)))

    def pad2(a, r, c):
        a = a.astype(f32)
        return jnp.pad(a, ((0, r - a.shape[0]), (0, c - a.shape[1])))

    # Algebraic fusion of the B / C branches (exact in f32).
    w_fused = jnp.eye(d_model, dtype=f32) + params["w_B"] + params["w_C"]
    b_fused = params["b_B"] + params["b_C"]

    w_in = pad2(params["w_in"], dp, mp).astype(compute_dtype)
    w_f = pad2(w_fused, mp, mp).astype(compute_dtype)
    w_out = pad2(params["w_out"], mp, dp).astype(compute_dtype)
    b_in = pad2(params["b_in"], 1, mp)
    b_f = pad2(b_fused, 1, mp)
    b_out = pad2(params["b_out"], 1, dp)
    gamma = pad2(params["gamma"], 1, dp)
    beta = pad2(params["beta"], 1, dp)

    row_spec = pl.BlockSpec((tm_eff, dp), lambda i: (i, 0))
    full = lambda arr: pl.BlockSpec(arr.shape, lambda i: (0,) * arr.ndim)

    kernel = functools.partial(_mamba_block_kernel, n_feat=d_input)

    out2d = pl.pallas_call(
        kernel,
        out_shape=jax.ShapeDtypeStruct((rows_p, dp), f32),
        grid=(rows_p // tm_eff,),
        in_specs=[
            row_spec,        # x            (rows_p, dp)
            full(w_in),      # (dp, mp)  bf16
            full(b_in),      # (1, mp)   f32
            full(w_f),       # (mp, mp)  bf16  (I + W_B + W_C)
            full(b_f),       # (1, mp)   f32   (b_B + b_C)
            full(w_out),     # (mp, dp)  bf16
            full(b_out),     # (1, dp)   f32
            full(gamma),     # (1, dp)   f32
            full(beta),      # (1, dp)   f32
        ],
        out_specs=row_spec,
        compiler_params=pltpu.CompilerParams(
            dimension_semantics=("parallel",),
            vmem_limit_bytes=64 * 1024 * 1024),
    )(x2d, w_in, b_in, w_f, b_f, w_out, b_out, gamma, beta)

    return out2d[:rows, :d_input].reshape(batch, seq, d_input)


def init_params(key, d_input, d_model):
    """Deterministic synthetic weights (shapes match the nn.Module)."""
    ks = jax.random.split(key, 8)
    scale_in = 1.0 / jnp.sqrt(d_input)
    scale_md = 1.0 / jnp.sqrt(d_model)
    return {
        # Linear weights stored pre-transposed: (in_features, out_features)
        "w_in": jax.random.normal(ks[0], (d_input, d_model), jnp.float32) * scale_in,
        "b_in": jax.random.normal(ks[1], (1, d_model), jnp.float32) * 0.01,
        "w_B": jax.random.normal(ks[2], (d_model, d_model), jnp.float32) * scale_md,
        "b_B": jax.random.normal(ks[3], (1, d_model), jnp.float32) * 0.01,
        "w_C": jax.random.normal(ks[4], (d_model, d_model), jnp.float32) * scale_md,
        "b_C": jax.random.normal(ks[5], (1, d_model), jnp.float32) * 0.01,
        "w_out": jax.random.normal(ks[6], (d_model, d_input), jnp.float32) * scale_md,
        "b_out": jax.random.normal(ks[7], (1, d_input), jnp.float32) * 0.01,
        # LayerNorm affine params (PyTorch default init: ones / zeros)
        "gamma": jnp.ones((1, d_input), jnp.float32),
        "beta": jnp.zeros((1, d_input), jnp.float32),
    }


def _reference_f32(x, p):
    """Pure-JAX f32 reference mirroring the PyTorch forward (eval dropout)."""
    h = x @ p["w_in"] + p["b_in"][0]
    b = h @ p["w_B"] + p["b_B"][0]
    c = h @ p["w_C"] + p["b_C"][0]
    h = jnp.maximum(h + b + c, 0.0)
    y = h @ p["w_out"] + p["b_out"][0]
    z = y + x
    mean = jnp.mean(z, axis=-1, keepdims=True)
    var = jnp.mean((z - mean) ** 2, axis=-1, keepdims=True)
    return (z - mean) / jnp.sqrt(var + 1e-5) * p["gamma"][0] + p["beta"][0]


def _reference_mirrored(x, p, compute_dtype=jnp.bfloat16):
    """Reference performing the SAME fusion / bf16 casts as the kernel."""
    cd = compute_dtype
    d_model = p["w_in"].shape[1]
    w_fused = jnp.eye(d_model, dtype=jnp.float32) + p["w_B"] + p["w_C"]
    b_fused = (p["b_B"] + p["b_C"])[0]
    h = jnp.dot(x.astype(cd), p["w_in"].astype(cd),
                preferred_element_type=jnp.float32) + p["b_in"][0]
    h = jnp.dot(h.astype(cd), w_fused.astype(cd),
                preferred_element_type=jnp.float32) + b_fused
    h = jnp.maximum(h, 0.0)
    y = jnp.dot(h.astype(cd), p["w_out"].astype(cd),
                preferred_element_type=jnp.float32) + p["b_out"][0]
    z = y + x
    mean = jnp.mean(z, axis=-1, keepdims=True)
    var = jnp.mean(z * z, axis=-1, keepdims=True) - mean * mean
    return (z - mean) * jax.lax.rsqrt(var + 1e-5) * p["gamma"][0] + p["beta"][0]


if __name__ == "__main__":
    batch, seq, d_input, d_model = 2, 8, 32, 64

    key = jax.random.PRNGKey(0)
    k_x, k_p = jax.random.split(key)
    x = jax.random.normal(k_x, (batch, seq, d_input), jnp.float32)
    params = init_params(k_p, d_input, d_model)

    out = custom_mamba_block(x, params, tm=256)
    out = jax.block_until_ready(out)
    assert out.shape == (batch, seq, d_input)

    # Tight check vs. a reference that mirrors the kernel's bf16/fusion math.
    ref_mirror = _reference_mirrored(x, params)
    assert jnp.allclose(out, ref_mirror, atol=2e-3, rtol=2e-3), \
        "mismatch vs mirrored-precision reference"

    # Coarse sanity check vs. the exact f32 module semantics (bf16 rounding
    # of the matmul operands is the only source of difference).
    ref_f32 = _reference_f32(x, params)
    assert jnp.allclose(out, ref_f32, atol=1e-1, rtol=1e-1), \
        "mismatch vs f32 module reference"

    print("KERNEL_OK")
</pallas_src>

<mosaic_0001>
module attributes {stable_mosaic.version = 11 : i64} {
  func.func @_mamba_block_kernel(%arg0: i32, %arg1: memref<16x128xf32, #tpu.memory_space<vmem>>, %arg2: memref<128x128xbf16, #tpu.memory_space<vmem>>, %arg3: memref<1x128xf32, #tpu.memory_space<vmem>>, %arg4: memref<128x128xbf16, #tpu.memory_space<vmem>>, %arg5: memref<1x128xf32, #tpu.memory_space<vmem>>, %arg6: memref<128x128xbf16, #tpu.memory_space<vmem>>, %arg7: memref<1x128xf32, #tpu.memory_space<vmem>>, %arg8: memref<1x128xf32, #tpu.memory_space<vmem>>, %arg9: memref<1x128xf32, #tpu.memory_space<vmem>>, %arg10: memref<16x128xf32, #tpu.memory_space<vmem>>) attributes {dimension_semantics = [#tpu.dimension_semantics<parallel>], iteration_bounds = array<i64: 1>, scalar_prefetch = 0 : i64, scratch_operands = 0 : i64, tpu.core_type = #tpu.core_type<tc>, window_params = [{transform_indices = @transform_0, window_bounds = array<i64: 16, 128>}, {pipeline_mode = #tpu.pipeline_mode<synchronous>, transform_indices = @transform_1, window_bounds = array<i64: 128, 128>}, {pipeline_mode = #tpu.pipeline_mode<synchronous>, transform_indices = @transform_2, window_bounds = array<i64: 1, 128>}, {pipeline_mode = #tpu.pipeline_mode<synchronous>, transform_indices = @transform_3, window_bounds = array<i64: 128, 128>}, {pipeline_mode = #tpu.pipeline_mode<synchronous>, transform_indices = @transform_4, window_bounds = array<i64: 1, 128>}, {pipeline_mode = #tpu.pipeline_mode<synchronous>, transform_indices = @transform_5, window_bounds = array<i64: 128, 128>}, {pipeline_mode = #tpu.pipeline_mode<synchronous>, transform_indices = @transform_6, window_bounds = array<i64: 1, 128>}, {pipeline_mode = #tpu.pipeline_mode<synchronous>, transform_indices = @transform_7, window_bounds = array<i64: 1, 128>}, {pipeline_mode = #tpu.pipeline_mode<synchronous>, transform_indices = @transform_8, window_bounds = array<i64: 1, 128>}, {transform_indices = @transform_9, window_bounds = array<i64: 16, 128>}]} {
    %c0 = arith.constant 0 : index
    %c0_0 = arith.constant 0 : index
    %0 = vector.load %arg1[%c0, %c0_0] : memref<16x128xf32, #tpu.memory_space<vmem>>, vector<16x128xf32>
    %1 = arith.truncf %0 : vector<16x128xf32> to vector<16x128xbf16>
    %c0_1 = arith.constant 0 : index
    %c0_2 = arith.constant 0 : index
    %2 = vector.load %arg2[%c0_1, %c0_2] : memref<128x128xbf16, #tpu.memory_space<vmem>>, vector<128x128xbf16>
    %cst = arith.constant dense<0.000000e+00> : vector<16x128xf32>
    %3 = tpu.matmul %1, %2, %cst {dimension_numbers = #tpu.dot_dimension_numbers<[1], [0], [0], [1], [0, 0, 1, 1], [], []>} : vector<16x128xbf16>, vector<128x128xbf16>, vector<16x128xf32> -> vector<16x128xf32>
    %c0_3 = arith.constant 0 : index
    %c0_4 = arith.constant 0 : index
    %4 = vector.load %arg3[%c0_3, %c0_4] : memref<1x128xf32, #tpu.memory_space<vmem>>, vector<1x128xf32>
    %5 = vector.broadcast %4 : vector<1x128xf32> to vector<16x128xf32>
    %6 = arith.addf %3, %5 : vector<16x128xf32>
    %7 = arith.truncf %6 : vector<16x128xf32> to vector<16x128xbf16>
    %c0_5 = arith.constant 0 : index
    %c0_6 = arith.constant 0 : index
    %8 = vector.load %arg4[%c0_5, %c0_6] : memref<128x128xbf16, #tpu.memory_space<vmem>>, vector<128x128xbf16>
    %cst_7 = arith.constant dense<0.000000e+00> : vector<16x128xf32>
    %9 = tpu.matmul %7, %8, %cst_7 {dimension_numbers = #tpu.dot_dimension_numbers<[1], [0], [0], [1], [0, 0, 1, 1], [], []>} : vector<16x128xbf16>, vector<128x128xbf16>, vector<16x128xf32> -> vector<16x128xf32>
    %c0_8 = arith.constant 0 : index
    %c0_9 = arith.constant 0 : index
    %10 = vector.load %arg5[%c0_8, %c0_9] : memref<1x128xf32, #tpu.memory_space<vmem>>, vector<1x128xf32>
    %11 = vector.broadcast %10 : vector<1x128xf32> to vector<16x128xf32>
    %12 = arith.addf %9, %11 : vector<16x128xf32>
    %cst_10 = arith.constant 0.000000e+00 : f32
    %13 = vector.broadcast %cst_10 : f32 to vector<16x128xf32>
    %14 = arith.maximumf %12, %13 : vector<16x128xf32>
    %15 = arith.truncf %14 : vector<16x128xf32> to vector<16x128xbf16>
    %c0_11 = arith.constant 0 : index
    %c0_12 = arith.constant 0 : index
    %16 = vector.load %arg6[%c0_11, %c0_12] : memref<128x128xbf16, #tpu.memory_space<vmem>>, vector<128x128xbf16>
    %cst_13 = arith.constant dense<0.000000e+00> : vector<16x128xf32>
    %17 = tpu.matmul %15, %16, %cst_13 {dimension_numbers = #tpu.dot_dimension_numbers<[1], [0], [0], [1], [0, 0, 1, 1], [], []>} : vector<16x128xbf16>, vector<128x128xbf16>, vector<16x128xf32> -> vector<16x128xf32>
    %c0_14 = arith.constant 0 : index
    %c0_15 = arith.constant 0 : index
    %18 = vector.load %arg7[%c0_14, %c0_15] : memref<1x128xf32, #tpu.memory_space<vmem>>, vector<1x128xf32>
    %19 = vector.broadcast %18 : vector<1x128xf32> to vector<16x128xf32>
    %20 = arith.addf %17, %19 : vector<16x128xf32>
    %21 = arith.addf %20, %0 : vector<16x128xf32>
    %cst_16 = arith.constant dense<0.000000e+00> : vector<16xf32>
    %22 = vector.multi_reduction <add>, %21, %cst_16 [1] : vector<16x128xf32> to vector<16xf32>
    %23 = vector.shape_cast %22 : vector<16xf32> to vector<16x1xf32>
    %cst_17 = arith.constant 3.125000e-02 : f32
    %24 = vector.broadcast %cst_17 : f32 to vector<16x1xf32>
    %25 = arith.mulf %23, %24 : vector<16x1xf32>
    %26 = arith.mulf %21, %21 : vector<16x128xf32>
    %cst_18 = arith.constant dense<0.000000e+00> : vector<16xf32>
    %27 = vector.multi_reduction <add>, %26, %cst_18 [1] : vector<16x128xf32> to vector<16xf32>
    %28 = vector.shape_cast %27 : vector<16xf32> to vector<16x1xf32>
    %cst_19 = arith.constant 3.125000e-02 : f32
    %29 = vector.broadcast %cst_19 : f32 to vector<16x1xf32>
    %30 = arith.mulf %28, %29 : vector<16x1xf32>
    %31 = arith.mulf %25, %25 : vector<16x1xf32>
    %32 = arith.subf %30, %31 : vector<16x1xf32>
    %33 = vector.broadcast %25 : vector<16x1xf32> to vector<16x128xf32>
    %34 = arith.subf %21, %33 : vector<16x128xf32>
    %cst_20 = arith.constant 9.99999974E-6 : f32
    %35 = vector.broadcast %cst_20 : f32 to vector<16x1xf32>
    %36 = arith.addf %32, %35 : vector<16x1xf32>
    %37 = math.rsqrt %36 : vector<16x1xf32>
    %38 = vector.broadcast %37 : vector<16x1xf32> to vector<16x128xf32>
    %39 = arith.mulf %34, %38 : vector<16x128xf32>
    %c0_21 = arith.constant 0 : index
    %c0_22 = arith.constant 0 : index
    %40 = vector.load %arg8[%c0_21, %c0_22] : memref<1x128xf32, #tpu.memory_space<vmem>>, vector<1x128xf32>
    %41 = vector.broadcast %40 : vector<1x128xf32> to vector<16x128xf32>
    %42 = arith.mulf %39, %41 : vector<16x128xf32>
    %c0_23 = arith.constant 0 : index
    %c0_24 = arith.constant 0 : index
    %43 = vector.load %arg9[%c0_23, %c0_24] : memref<1x128xf32, #tpu.memory_space<vmem>>, vector<1x128xf32>
    %44 = vector.broadcast %43 : vector<1x128xf32> to vector<16x128xf32>
    %45 = arith.addf %42, %44 : vector<16x128xf32>
    %c0_25 = arith.constant 0 : index
    %c0_26 = arith.constant 0 : index
    %46 = vector.load %arg10[%c0_25, %c0_26] : memref<16x128xf32, #tpu.memory_space<vmem>>, vector<16x128xf32>
    tpu.vector_store %arg10[%c0_25, %c0_26], %45 {strides = array<i32>} : memref<16x128xf32, #tpu.memory_space<vmem>>, vector<16x128xf32>,
    return
  }
  func.func @transform_0(%arg0: i32) -> (i32, i32) {
    %c0_i32 = arith.constant 0 : i32
    %c0_i32_0 = arith.constant 0 : i32
    return %arg0, %c0_i32 : i32, i32
  }
  func.func @transform_1(%arg0: i32) -> (i32, i32) {
    %c0_i32 = arith.constant 0 : i32
    %c0_i32_0 = arith.constant 0 : i32
    %c0_i32_1 = arith.constant 0 : i32
    return %c0_i32, %c0_i32_0 : i32, i32
  }
  func.func @transform_2(%arg0: i32) -> (i32, i32) {
    %c0_i32 = arith.constant 0 : i32
    %c0_i32_0 = arith.constant 0 : i32
    %c0_i32_1 = arith.constant 0 : i32
    return %c0_i32, %c0_i32_0 : i32, i32
  }
  func.func @transform_3(%arg0: i32) -> (i32, i32) {
    %c0_i32 = arith.constant 0 : i32
    %c0_i32_0 = arith.constant 0 : i32
    %c0_i32_1 = arith.constant 0 : i32
    return %c0_i32, %c0_i32_0 : i32, i32
  }
  func.func @transform_4(%arg0: i32) -> (i32, i32) {
    %c0_i32 = arith.constant 0 : i32
    %c0_i32_0 = arith.constant 0 : i32
    %c0_i32_1 = arith.constant 0 : i32
    return %c0_i32, %c0_i32_0 : i32, i32
  }
  func.func @transform_5(%arg0: i32) -> (i32, i32) {
    %c0_i32 = arith.constant 0 : i32
    %c0_i32_0 = arith.constant 0 : i32
    %c0_i32_1 = arith.constant 0 : i32
    return %c0_i32, %c0_i32_0 : i32, i32
  }
  func.func @transform_6(%arg0: i32) -> (i32, i32) {
    %c0_i32 = arith.constant 0 : i32
    %c0_i32_0 = arith.constant 0 : i32
    %c0_i32_1 = arith.constant 0 : i32
    return %c0_i32, %c0_i32_0 : i32, i32
  }
  func.func @transform_7(%arg0: i32) -> (i32, i32) {
    %c0_i32 = arith.constant 0 : i32
    %c0_i32_0 = arith.constant 0 : i32
    %c0_i32_1 = arith.constant 0 : i32
    return %c0_i32, %c0_i32_0 : i32, i32
  }
  func.func @transform_8(%arg0: i32) -> (i32, i32) {
    %c0_i32 = arith.constant 0 : i32
    %c0_i32_0 = arith.constant 0 : i32
    %c0_i32_1 = arith.constant 0 : i32
    return %c0_i32, %c0_i32_0 : i32, i32
  }
  func.func @transform_9(%arg0: i32) -> (i32, i32) {
    %c0_i32 = arith.constant 0 : i32
    %c0_i32_0 = arith.constant 0 : i32
    return %arg0, %c0_i32 : i32, i32
  }
}

</mosaic_0001>

<llo_original>
// kernel: custom_mamba_block.1
$region0: #{custom_mamba_block.1}
  #allocation0 [shape = 'u32[]', space=smem, size = 0x4, offset = 0x4, fixed_abs, tag = 'smem constant byte address 0x4 - core index']
  #allocation1 [shape = 'u32[144,128]{1,0:T(1,128)}', space=vmem, size = 0x12000, scoped, tag = 'internal scratch']
  %s0 = inlined_call_operand.vmem [shape: f32[16,128], index: 0, kind: input, shape index: {}]
  %s1 = inlined_call_operand.vmem [shape: bf16[128,128], index: 1, kind: input, shape index: {}]
  %s2 = inlined_call_operand.vmem [shape: f32[1,128], index: 2, kind: input, shape index: {}]
  %s3 = inlined_call_operand.vmem [shape: bf16[128,128], index: 3, kind: input, shape index: {}]
  %s4 = inlined_call_operand.vmem [shape: f32[1,128], index: 4, kind: input, shape index: {}]
  %s5 = inlined_call_operand.vmem [shape: bf16[128,128], index: 5, kind: input, shape index: {}]
  %s6 = inlined_call_operand.vmem [shape: f32[1,128], index: 6, kind: input, shape index: {}]
  %s7 = inlined_call_operand.vmem [shape: f32[1,128], index: 7, kind: input, shape index: {}]
  %s8 = inlined_call_operand.vmem [shape: f32[1,128], index: 8, kind: input, shape index: {}]
  %s9 = inlined_call_operand.vmem [shape: f32[16,128], index: 9, kind: output, shape index: {}]
  %s10 = sld [smem:[#allocation0]]
  $region46: #{custom_mamba_block.1} parent=0
    _
  %s12 = ssub.s32 1, %s10
  %s13 = scalar_select 0, %s12, %s10
  // Predicated region
  $region2: #{custom_mamba_block.1} parent=0 // pred_check
    _
  $region3: #{custom_mamba_block.1} parent=0 // pred_check_branch
    %15 = sbr.rel (0) target = $region5
  $region4: #{custom_mamba_block.1} parent=0 // pred_region
    _
  $region5: #{custom_mamba_block.1} parent=0 // pred_fallthru
    _
  // Predicated region
  $region6: #{custom_mamba_block.1} parent=0 // pred_check
    _
  $region7: #{custom_mamba_block.1} parent=0 // pred_check_branch
    %17 = sbr.rel (0) target = $region9
  $region8: #{custom_mamba_block.1} parent=0 // pred_region
    _
  $region9: #{custom_mamba_block.1} parent=0 // pred_fallthru
    _
  // Predicated region
  $region10: #{custom_mamba_block.1} parent=0 // pred_check
    _
  $region11: #{custom_mamba_block.1} parent=0 // pred_check_branch
    %19 = sbr.rel (0) target = $region13
  $region12: #{custom_mamba_block.1} parent=0 // pred_region
    _
  $region13: #{custom_mamba_block.1} parent=0 // pred_fallthru
    _
  // Predicated region
  $region14: #{custom_mamba_block.1} parent=0 // pred_check
    _
  $region15: #{custom_mamba_block.1} parent=0 // pred_check_branch
    %21 = sbr.rel (0) target = $region17
  $region16: #{custom_mamba_block.1} parent=0 // pred_region
    _
  $region17: #{custom_mamba_block.1} parent=0 // pred_fallthru
    _
  // Predicated region
  $region18: #{custom_mamba_block.1} parent=0 // pred_check
    _
  $region19: #{custom_mamba_block.1} parent=0 // pred_check_branch
    %23 = sbr.rel (0) target = $region21
  $region20: #{custom_mamba_block.1} parent=0 // pred_region
    _
  $region21: #{custom_mamba_block.1} parent=0 // pred_fallthru
    _
  // Predicated region
  $region22: #{custom_mamba_block.1} parent=0 // pred_check
    _
  $region23: #{custom_mamba_block.1} parent=0 // pred_check_branch
    %25 = sbr.rel (0) target = $region25
  $region24: #{custom_mamba_block.1} parent=0 // pred_region
    _
  $region25: #{custom_mamba_block.1} parent=0 // pred_fallthru
    _
  // Predicated region
  $region26: #{custom_mamba_block.1} parent=0 // pred_check
    _
  $region27: #{custom_mamba_block.1} parent=0 // pred_check_branch
    %27 = sbr.rel (0) target = $region29
  $region28: #{custom_mamba_block.1} parent=0 // pred_region
    _
  $region29: #{custom_mamba_block.1} parent=0 // pred_fallthru
    _
  // Predicated region
  $region30: #{custom_mamba_block.1} parent=0 // pred_check
    _
  $region31: #{custom_mamba_block.1} parent=0 // pred_check_branch
    %29 = sbr.rel (0) target = $region33
  $region32: #{custom_mamba_block.1} parent=0 // pred_region
    _
  $region33: #{custom_mamba_block.1} parent=0 // pred_fallthru
    _
  // Predicated region
  $region34: #{custom_mamba_block.1} parent=0 // pred_check
    _
  $region35: #{custom_mamba_block.1} parent=0 // pred_check_branch
    %31 = sbr.rel (0) target = $region37
  $region36: #{custom_mamba_block.1} parent=0 // pred_region
    _
  $region37: #{custom_mamba_block.1} parent=0 // pred_fallthru
    _
  %v33 = vld [vmem:[%s0] sm:$0xff]
  %v34 = vld [vmem:[%s0 + $0x8] sm:$0xff]
  %v35 = vpack.c.bf16 %v34, %v33
  %v36 = vld [vmem:[%s1] sm:$0xf]
  %v37 = vld [vmem:[%s1 + $0x4] sm:$0xf]
  %v38 = vld [vmem:[%s1 + $0x8] sm:$0xf]
  %v39 = vld [vmem:[%s1 + $0xc] sm:$0xf]
  %v40 = vld [vmem:[%s1 + $0x10] sm:$0xf]
  %v41 = vld [vmem:[%s1 + $0x14] sm:$0xf]
  %v42 = vld [vmem:[%s1 + $0x18] sm:$0xf]
  %v43 = vld [vmem:[%s1 + $0x1c] sm:$0xf]
  %v44 = vld [vmem:[%s1 + $0x20] sm:$0xf]
  %v45 = vld [vmem:[%s1 + $0x24] sm:$0xf]
  %v46 = vld [vmem:[%s1 + $0x28] sm:$0xf]
  %v47 = vld [vmem:[%s1 + $0x2c] sm:$0xf]
  %v48 = vld [vmem:[%s1 + $0x30] sm:$0xf]
  %v49 = vld [vmem:[%s1 + $0x34] sm:$0xf]
  %v50 = vld [vmem:[%s1 + $0x38] sm:$0xf]
  %v51 = vld [vmem:[%s1 + $0x3c] sm:$0xf]
  %v52 = vld [vmem:[%s2] sm:$0x1]
  %v54 = vlaneseq
  %v55 = vshrl.u32 %v54, 7
  %v56 = vsub.s32 0, %v55
  %v57 = vrot.slane %v52, %v56
  %v75 = vunpack.c.l.b16 %v36
  %v76 = vunpack.c.l.b16 %v37
  %v77 = vunpack.c.l.b16 %v38
  %v78 = vunpack.c.l.b16 %v39
  %v79 = vunpack.c.l.b16 %v40
  %v80 = vunpack.c.l.b16 %v41
  %v81 = vunpack.c.l.b16 %v42
  %v82 = vunpack.c.l.b16 %v43
  %v83 = vunpack.c.l.b16 %v44
  %v84 = vunpack.c.l.b16 %v45
  %v85 = vunpack.c.l.b16 %v46
  %v86 = vunpack.c.l.b16 %v47
  %v87 = vunpack.c.l.b16 %v48
  %v88 = vunpack.c.l.b16 %v49
  %v89 = vunpack.c.l.b16 %v50
  %v90 = vunpack.c.l.b16 %v51
  %v91 = vpack.c.b16 %v76, %v75
  %v92 = vpack.c.b16 %v78, %v77
  %v93 = vpack.c.b16 %v80, %v79
  %v94 = vpack.c.b16 %v82, %v81
  %v95 = vpack.c.b16 %v84, %v83
  %v96 = vpack.c.b16 %v86, %v85
  %v97 = vpack.c.b16 %v88, %v87
  %v98 = vpack.c.b16 %v90, %v89
  %107 = vmatprep.subr.bf16.mxu0 0
  %108 = vmatpush1.bf16.msra.mxu0 %v98
  %109 = vmatprep.subr.bf16.mxu0 0
  %110 = vmatpush1.bf16.msra.mxu0 %v97
  %111 = vmatprep.subr.bf16.mxu0 0
  %112 = vmatpush1.bf16.msra.mxu0 %v96
  %113 = vmatprep.subr.bf16.mxu0 0
  %114 = vmatpush1.bf16.msra.mxu0 %v95
  %115 = vmatprep.subr.bf16.mxu0 0
  %116 = vmatpush1.bf16.msra.mxu0 %v94
  %117 = vmatprep.subr.bf16.mxu0 0
  %118 = vmatpush1.bf16.msra.mxu0 %v93
  %119 = vmatprep.subr.bf16.mxu0 0
  %120 = vmatpush1.bf16.msra.mxu0 %v92
  %121 = vmatprep.subr.bf16.mxu0 0
  %122 = vmatpush1.bf16.msra.mxu0 %v91
  %123 = vmatprep.subr.bf16.mxu0 0
  %124 = vmatpush2.bf16.msra.mxu0 0
  %125 = vmatprep.subr.bf16.mxu0 0
  %126 = vmatpush2.bf16.msra.mxu0 0
  %127 = vmatprep.subr.bf16.mxu0 0
  %128 = vmatpush2.bf16.msra.mxu0 0
  %129 = vmatprep.subr.bf16.mxu0 0
  %130 = vmatpush2.bf16.msra.mxu0 0
  %131 = vmatprep.subr.bf16.mxu0 0
  %132 = vmatpush2.bf16.msra.mxu0 0
  %133 = vmatprep.subr.bf16.mxu0 0
  %134 = vmatpush2.bf16.msra.mxu0 0
  %135 = vmatprep.subr.bf16.mxu0 0
  %136 = vmatpush2.bf16.msra.mxu0 0
  %137 = vmatprep.subr.bf16.mxu0 0
  %138 = vmatpush2.bf16.msra.mxu0 0
  %139 = vmatprep.mubr.bf16.mxu0 0
  %140 = vmatmul.mubr.bf16.gmra.mxu0 %v35
  %v141 = vpop.f32.mrf.mxu0
  %v142 = vadd.f32 %v57, %v141
  %v143 = vpop.f32.mrf.mxu0
  %v144 = vpop.f32.mrf.mxu0
  %v145 = vadd.f32 %v57, %v144
  %v146 = vpop.f32.mrf.mxu0
  %147 = vdwg.mxu0
  %v148 = vpack.c.bf16 %v145, %v142
  %v149 = vld [vmem:[%s3] sm:$0xf]
  %v150 = vld [vmem:[%s3 + $0x4] sm:$0xf]
  %v151 = vld [vmem:[%s3 + $0x8] sm:$0xf]
  %v152 = vld [vmem:[%s3 + $0xc] sm:$0xf]
  %v153 = vld [vmem:[%s3 + $0x10] sm:$0xf]
  %v154 = vld [vmem:[%s3 + $0x14] sm:$0xf]
  %v155 = vld [vmem:[%s3 + $0x18] sm:$0xf]
  %v156 = vld [vmem:[%s3 + $0x1c] sm:$0xf]
  %v157 = vld [vmem:[%s3 + $0x20] sm:$0xf]
  %v158 = vld [vmem:[%s3 + $0x24] sm:$0xf]
  %v159 = vld [vmem:[%s3 + $0x28] sm:$0xf]
  %v160 = vld [vmem:[%s3 + $0x2c] sm:$0xf]
  %v161 = vld [vmem:[%s3 + $0x30] sm:$0xf]
  %v162 = vld [vmem:[%s3 + $0x34] sm:$0xf]
  %v163 = vld [vmem:[%s3 + $0x38] sm:$0xf]
  %v164 = vld [vmem:[%s3 + $0x3c] sm:$0xf]
  %v165 = vld [vmem:[%s4] sm:$0x1]
  %v167 = vlaneseq
  %v168 = vshrl.u32 %v167, 7
  %v169 = vsub.s32 0, %v168
  %v170 = vrot.slane %v165, %v169
  %v188 = vunpack.c.l.b16 %v149
  %v189 = vunpack.c.l.b16 %v150
  %v190 = vunpack.c.l.b16 %v151
  %v191 = vunpack.c.l.b16 %v152
  %v192 = vunpack.c.l.b16 %v153
  %v193 = vunpack.c.l.b16 %v154
  %v194 = vunpack.c.l.b16 %v155
  %v195 = vunpack.c.l.b16 %v156
  %v196 = vunpack.c.l.b16 %v157
  %v197 = vunpack.c.l.b16 %v158
  %v198 = vunpack.c.l.b16 %v159
  %v199 = vunpack.c.l.b16 %v160
  %v200 = vunpack.c.l.b16 %v161
  %v201 = vunpack.c.l.b16 %v162
  %v202 = vunpack.c.l.b16 %v163
  %v203 = vunpack.c.l.b16 %v164
  %v204 = vpack.c.b16 %v189, %v188
  %v205 = vpack.c.b16 %v191, %v190
  %v206 = vpack.c.b16 %v193, %v192
  %v207 = vpack.c.b16 %v195, %v194
  %v208 = vpack.c.b16 %v197, %v196
  %v209 = vpack.c.b16 %v199, %v198
  %v210 = vpack.c.b16 %v201, %v200
  %v211 = vpack.c.b16 %v203, %v202
  %220 = vmatprep.subr.bf16.mxu0 0
  %221 = vmatpush1.bf16.msra.mxu0 %v211
  %222 = vmatprep.subr.bf16.mxu0 0
  %223 = vmatpush1.bf16.msra.mxu0 %v210
  %224 = vmatprep.subr.bf16.mxu0 0
  %225 = vmatpush1.bf16.msra.mxu0 %v209
  %226 = vmatprep.subr.bf16.mxu0 0
  %227 = vmatpush1.bf16.msra.mxu0 %v208
  %228 = vmatprep.subr.bf16.mxu0 0
  %229 = vmatpush1.bf16.msra.mxu0 %v207
  %230 = vmatprep.subr.bf16.mxu0 0
  %231 = vmatpush1.bf16.msra.mxu0 %v206
  %232 = vmatprep.subr.bf16.mxu0 0
  %233 = vmatpush1.bf16.msra.mxu0 %v205
  %234 = vmatprep.subr.bf16.mxu0 0
  %235 = vmatpush1.bf16.msra.mxu0 %v204
  %236 = vmatprep.subr.bf16.mxu0 0
  %237 = vmatpush2.bf16.msra.mxu0 0
  %238 = vmatprep.subr.bf16.mxu0 0
  %239 = vmatpush2.bf16.msra.mxu0 0
  %240 = vmatprep.subr.bf16.mxu0 0
  %241 = vmatpush2.bf16.msra.mxu0 0
  %242 = vmatprep.subr.bf16.mxu0 0
  %243 = vmatpush2.bf16.msra.mxu0 0
  %244 = vmatprep.subr.bf16.mxu0 0
  %245 = vmatpush2.bf16.msra.mxu0 0
  %246 = vmatprep.subr.bf16.mxu0 0
  %247 = vmatpush2.bf16.msra.mxu0 0
  %248 = vmatprep.subr.bf16.mxu0 0
  %249 = vmatpush2.bf16.msra.mxu0 0
  %250 = vmatprep.subr.bf16.mxu0 0
  %251 = vmatpush2.bf16.msra.mxu0 0
  %252 = vmatprep.mubr.bf16.mxu0 0
  %253 = vmatmul.mubr.bf16.gmra.mxu0 %v148
  %v254 = vpop.f32.mrf.mxu0
  %v255 = vadd.f32 %v170, %v254
  %v256 = vpop.f32.mrf.mxu0
  %v257 = vpop.f32.mrf.mxu0
  %v258 = vadd.f32 %v170, %v257
  %v259 = vpop.f32.mrf.mxu0
  %260 = vdwg.mxu0
  %v261 = vmax.f32 %v255, 0.0
  %v262 = vmax.f32 %v258, 0.0
  %v263 = vpack.c.bf16 %v262, %v261
  %v264 = vld [vmem:[%s5] sm:$0xf]
  %v265 = vld [vmem:[%s5 + $0x4] sm:$0xf]
  %v266 = vld [vmem:[%s5 + $0x8] sm:$0xf]
  %v267 = vld [vmem:[%s5 + $0xc] sm:$0xf]
  %v268 = vld [vmem:[%s5 + $0x10] sm:$0xf]
  %v269 = vld [vmem:[%s5 + $0x14] sm:$0xf]
  %v270 = vld [vmem:[%s5 + $0x18] sm:$0xf]
  %v271 = vld [vmem:[%s5 + $0x1c] sm:$0xf]
  %v272 = vld [vmem:[%s5 + $0x20] sm:$0xf]
  %v273 = vld [vmem:[%s5 + $0x24] sm:$0xf]
  %v274 = vld [vmem:[%s5 + $0x28] sm:$0xf]
  %v275 = vld [vmem:[%s5 + $0x2c] sm:$0xf]
  %v276 = vld [vmem:[%s5 + $0x30] sm:$0xf]
  %v277 = vld [vmem:[%s5 + $0x34] sm:$0xf]
  %v278 = vld [vmem:[%s5 + $0x38] sm:$0xf]
  %v279 = vld [vmem:[%s5 + $0x3c] sm:$0xf]
  %v280 = vld [vmem:[%s6] sm:$0x1]
  %v282 = vlaneseq
  %v283 = vshrl.u32 %v282, 7
  %v284 = vsub.s32 0, %v283
  %v285 = vrot.slane %v280, %v284
  %v303 = vunpack.c.l.b16 %v264
  %v304 = vunpack.c.l.b16 %v265
  %v305 = vunpack.c.l.b16 %v266
  %v306 = vunpack.c.l.b16 %v267
  %v307 = vunpack.c.l.b16 %v268
  %v308 = vunpack.c.l.b16 %v269
  %v309 = vunpack.c.l.b16 %v270
  %v310 = vunpack.c.l.b16 %v271
  %v311 = vunpack.c.l.b16 %v272
  %v312 = vunpack.c.l.b16 %v273
  %v313 = vunpack.c.l.b16 %v274
  %v314 = vunpack.c.l.b16 %v275
  %v315 = vunpack.c.l.b16 %v276
  %v316 = vunpack.c.l.b16 %v277
  %v317 = vunpack.c.l.b16 %v278
  %v318 = vunpack.c.l.b16 %v279
  %v319 = vpack.c.b16 %v304, %v303
  %v320 = vpack.c.b16 %v306, %v305
  %v321 = vpack.c.b16 %v308, %v307
  %v322 = vpack.c.b16 %v310, %v309
  %v323 = vpack.c.b16 %v312, %v311
  %v324 = vpack.c.b16 %v314, %v313
  %v325 = vpack.c.b16 %v316, %v315
  %v326 = vpack.c.b16 %v318, %v317
  %335 = vmatprep.subr.bf16.mxu0 0
  %336 = vmatpush1.bf16.msra.mxu0 %v326
  %337 = vmatprep.subr.bf16.mxu0 0
  %338 = vmatpush1.bf16.msra.mxu0 %v325
  %339 = vmatprep.subr.bf16.mxu0 0
  %340 = vmatpush1.bf16.msra.mxu0 %v324
  %341 = vmatprep.subr.bf16.mxu0 0
  %342 = vmatpush1.bf16.msra.mxu0 %v323
  %343 = vmatprep.subr.bf16.mxu0 0
  %344 = vmatpush1.bf16.msra.mxu0 %v322
  %345 = vmatprep.subr.bf16.mxu0 0
  %346 = vmatpush1.bf16.msra.mxu0 %v321
  %347 = vmatprep.subr.bf16.mxu0 0
  %348 = vmatpush1.bf16.msra.mxu0 %v320
  %349 = vmatprep.subr.bf16.mxu0 0
  %350 = vmatpush1.bf16.msra.mxu0 %v319
  %351 = vmatprep.subr.bf16.mxu0 0
  %352 = vmatpush2.bf16.msra.mxu0 0
  %353 = vmatprep.subr.bf16.mxu0 0
  %354 = vmatpush2.bf16.msra.mxu0 0
  %355 = vmatprep.subr.bf16.mxu0 0
  %356 = vmatpush2.bf16.msra.mxu0 0
  %357 = vmatprep.subr.bf16.mxu0 0
  %358 = vmatpush2.bf16.msra.mxu0 0
  %359 = vmatprep.subr.bf16.mxu0 0
  %360 = vmatpush2.bf16.msra.mxu0 0
  %361 = vmatprep.subr.bf16.mxu0 0
  %362 = vmatpush2.bf16.msra.mxu0 0
  %363 = vmatprep.subr.bf16.mxu0 0
  %364 = vmatpush2.bf16.msra.mxu0 0
  %365 = vmatprep.subr.bf16.mxu0 0
  %366 = vmatpush2.bf16.msra.mxu0 0
  %367 = vmatprep.mubr.bf16.mxu0 0
  %368 = vmatmul.mubr.bf16.gmra.mxu0 %v263
  %v369 = vpop.f32.mrf.mxu0
  %v370 = vadd.f32 %v285, %v369
  %v371 = vpop.f32.mrf.mxu0
  %v372 = vpop.f32.mrf.mxu0
  %v373 = vadd.f32 %v285, %v372
  %v374 = vpop.f32.mrf.mxu0
  %375 = vdwg.mxu0
  %v376 = vadd.f32 %v370, %v33
  %v377 = vadd.f32 %v373, %v34
  %378 = vadd.xlane.f32.xlu0 %v376
  %v379 = vpop.xlane.xlu0 %378
  %380 = vadd.xlane.f32.xlu0 %v377
  %v381 = vpop.xlane.xlu0 %380
  %v382 = vmul.f32 %v379, 0.03125
  %v383 = vmul.f32 %v381, 0.03125
  %v384 = vmul.f32 %v376, %v376
  %v385 = vmul.f32 %v377, %v377
  %386 = vadd.xlane.f32.xlu0 %v384
  %v387 = vpop.xlane.xlu0 %386
  %388 = vadd.xlane.f32.xlu0 %v385
  %v389 = vpop.xlane.xlu0 %388
  %v390 = vmul.f32 %v387, 0.03125
  %v391 = vmul.f32 %v389, 0.03125
  %v392 = vmul.f32 %v382, %v382
  %v393 = vmul.f32 %v383, %v383
  %v394 = vsub.f32 %v390, %v392
  %v395 = vsub.f32 %v391, %v393
  %v396 = vsub.f32 %v376, %v382
  %v397 = vsub.f32 %v377, %v383
  %v398 = vadd.f32 %v394, 1e-05
  %v399 = vadd.f32 %v395, 1e-05
  %v400 = vrsqrt.pop %v398
  %v401 = vrsqrt.pop %v399
  %v402 = vmul.f32 %v396, %v400
  %v403 = vmul.f32 %v397, %v401
  %v404 = vld [vmem:[%s7] sm:$0x1]
  %v406 = vlaneseq
  %v407 = vshrl.u32 %v406, 7
  %v408 = vsub.s32 0, %v407
  %v409 = vrot.slane %v404, %v408
  %v411 = vmul.f32 %v402, %v409
  %v412 = vmul.f32 %v403, %v409
  %v413 = vld [vmem:[%s8] sm:$0x1]
  %v415 = vlaneseq
  %v416 = vshrl.u32 %v415, 7
  %v417 = vsub.s32 0, %v416
  %v418 = vrot.slane %v413, %v417
  %v420 = vadd.f32 %v411, %v418
  %v421 = vadd.f32 %v412, %v418
  %422 = vst [vmem:[%s9] sm:$0xff] %v420
  %423 = vst [vmem:[%s9 + $0x8] sm:$0xff] %v421
  // Predicated region
  $region38: #{custom_mamba_block.1} parent=0 // pred_check
    _
  $region39: #{custom_mamba_block.1} parent=0 // pred_check_branch
    %425 = sbr.rel (0) target = $region41
  $region40: #{custom_mamba_block.1} parent=0 // pred_region
    _
  $region41: #{custom_mamba_block.1} parent=0 // pred_fallthru
    _
  // Predicated region
  $region42: #{custom_mamba_block.1} parent=0 // pred_check
    _
  $region43: #{custom_mamba_block.1} parent=0 // pred_check_branch
    %427 = sbr.rel (0) target = $region45
  $region44: #{custom_mamba_block.1} parent=0 // pred_region
    _
  $region45: #{custom_mamba_block.1} parent=0 // pred_fallthru
    _

</llo_original>
